<compile_context>
chip_gen: v6e
topology: v6e:2x2x1
jax: 0.10.0
libtpu: 0.0.40
codegen_flags: <defaults>
</compile_context>

<pallas_src>
import functools

import jax
import jax.numpy as jnp
from jax.experimental import pallas as pl
from jax.experimental.pallas import tpu as pltpu

# Module hyper-parameters (deterministic, from DiceLoss.__init__ defaults)
SMOOTH = 1.0
EXPONENT = 2.0          # default exponent
IGNORE_INDEX = 255
LOSS_WEIGHT = 1.0
CLASS_WEIGHT = None     # default: no per-class weights
# TODO(synk): class_weight given as a str (file path) is not supported — no file I/O in-kernel.

_LANE = 128


def _pow(x, e):
    # exponent defaults to 2 -> keep it a cheap VPU multiply instead of jnp.power
    if e == 2.0:
        return x * x
    return jnp.power(x, e)


def _dice_partial_kernel(pred_ref, tgt_ref, num_ref, den_ref, *,
                         hw, tile, n_classes, k_tiles, n_inner,
                         has_tail, has_phantom):
    """Accumulates per-(n, hw_outer, c) partial dice sums over inner spatial tiles.

    pred_ref: [1, C, T]  logits tile (native dtype)
    tgt_ref:  [1, 1, T]  labels tile (native integer dtype)
    num_ref:  [1, 1, C]  f32 partial sum of softmax*onehot*valid  (output-as-accumulator)
    den_ref:  [1, 1, C]  f32 partial sum of softmax^e + onehot    (output-as-accumulator)
    """
    o = pl.program_id(1)
    i = pl.program_id(2)
    g = o * n_inner + i                      # global spatial tile index

    @pl.when(i == 0)
    def _init():
        num_ref[...] = jnp.zeros_like(num_ref)
        den_ref[...] = jnp.zeros_like(den_ref)

    def accumulate(tail):
        p = pred_ref[...].astype(jnp.float32)             # [1, C, T]
        t = tgt_ref[...].astype(jnp.int32)                # [1, 1, T]

        if tail:
            # Ragged last tile: no wrapper-side pad, so lanes past HW hold
            # garbage. Mask pred BEFORE max/exp so the softmax stays finite.
            col = (jax.lax.broadcasted_iota(jnp.int32, t.shape, 2)
                   + (k_tiles - 1) * tile)                # [1, 1, T]
            inb = col < hw                                # [1, 1, T]
            p = jnp.where(inb, p, 0.0)

        # numerically-stable softmax over the class (sublane) axis
        m = jnp.max(p, axis=1, keepdims=True)             # [1, 1, T]
        e = jnp.exp(p - m)                                # [1, C, T]
        inv = pl.reciprocal(jnp.sum(e, axis=1, keepdims=True), approx=True)
        sm = e * inv                                      # [1, C, T]

        # one-hot / valid handling via a single class-iota compare + selects
        t_cl = jnp.clip(t, 0, n_classes - 1)              # [1, 1, T]
        cls = jax.lax.broadcasted_iota(jnp.int32, sm.shape, 1)
        eq = cls == t_cl                                  # [1, C, T]
        valid = t != IGNORE_INDEX                         # [1, 1, T]

        sq = _pow(sm, EXPONENT)                           # [1, C, T]
        if tail:
            valid = valid & inb
            sq = jnp.where(inb, sq, 0.0)
            onehot = jnp.where(eq & inb, 1.0, 0.0)
        else:
            onehot = jnp.where(eq, 1.0, 0.0)

        # numerator: sum(sm * onehot * valid); denominator: sum(sm^e + onehot^e)
        # (onehot^e == onehot for 0/1 values; the denominator is NOT masked by
        #  valid — exactly as in the PyTorch code)
        num_c = jnp.sum(jnp.where(eq & valid, sm, 0.0), axis=-1)       # [1, C]
        den_c = jnp.sum(sq, axis=-1) + jnp.sum(onehot, axis=-1)        # [1, C]
        num_ref[...] += num_c[:, None, :]
        den_ref[...] += den_c[:, None, :]

    last = k_tiles - 1
    if has_tail:
        # Steady-state tiles pay zero masking ops; only the single tail tile
        # runs the masked path. Phantom steps (g >= k_tiles) match neither
        # branch and are skipped.
        @pl.when(g < last)
        def _full():
            accumulate(tail=False)

        @pl.when(g == last)
        def _tail():
            accumulate(tail=True)
    elif has_phantom:
        @pl.when(g < k_tiles)
        def _full():
            accumulate(tail=False)
    else:
        accumulate(tail=False)


def _pick_hw_tile(n_classes, hw, pred_itemsize, tgt_itemsize):
    """Spatial tile (multiple of 128) from a v7x-safe (64 MiB VMEM) budget."""
    c_pad = pl.cdiv(n_classes, 8) * 8                  # sublane padding of class axis
    # per-column VMEM bytes:
    #   double-buffered pred block   : 2 * c_pad * pred_itemsize
    #   double-buffered target block : 2 * 8 * tgt_itemsize   (sublane-padded to 8)
    #   in-kernel f32/i32 temporaries: ~(8*c_pad + 6*8) * 4
    per_col = 2 * (c_pad * pred_itemsize + 8 * tgt_itemsize) + (8 * c_pad + 48) * 4
    budget = 32 * 1024 * 1024                          # headroom under the 48 MiB limit
    t = (budget // per_col) // _LANE * _LANE
    t = max(_LANE, min(t, 64 * 1024))
    return int(min(t, pl.cdiv(hw, _LANE) * _LANE))     # never wider than (128-rounded) HW


def dice_loss(pred, target, *, tile=None):
    """pred: [N, C, H, W] float logits; target: [N, H, W] int labels. Returns scalar loss."""
    N, C, H, W = pred.shape
    HW = H * W

    # keep both tensors in their native dtypes (bf16 pred stays bf16 in HBM,
    # uint8/int16 labels are NOT widened to int32) — the kernel upcasts per tile.
    pred_flat = pred.reshape(N, C, HW)
    target_flat = target.reshape(N, 1, HW)

    if tile is None:
        tile = _pick_hw_tile(C, HW, jnp.dtype(pred.dtype).itemsize,
                             jnp.dtype(target.dtype).itemsize)
    tile = max(_LANE, (int(tile) // _LANE) * _LANE)
    tile = min(tile, pl.cdiv(HW, _LANE) * _LANE)

    k_tiles = pl.cdiv(HW, tile)
    has_tail = (HW % tile) != 0

    # megacore: split the spatial reduction into (outer "parallel", inner
    # "arbitrary") so both v7x TensorCores get work even when N is small/odd.
    n_outer = min(k_tiles, max(1, pl.cdiv(8, N)))
    n_inner = pl.cdiv(k_tiles, n_outer)
    n_outer = pl.cdiv(k_tiles, n_inner)                # trim fully-phantom outer chunks
    has_phantom = (n_outer * n_inner) != k_tiles

    def in_map(n, o, i):
        g = o * n_inner + i
        if has_phantom:
            g = jnp.minimum(g, k_tiles - 1)            # phantom steps re-read the last tile
        return (n, 0, g)

    def out_map(n, o, i):                              # constant across the inner axis
        return (n * n_outer + o, 0, 0)

    kernel = functools.partial(
        _dice_partial_kernel, hw=HW, tile=tile, n_classes=C, k_tiles=k_tiles,
        n_inner=n_inner, has_tail=has_tail, has_phantom=has_phantom)

    num_part, den_part = pl.pallas_call(
        kernel,
        out_shape=(jax.ShapeDtypeStruct((N * n_outer, 1, C), jnp.float32),
                   jax.ShapeDtypeStruct((N * n_outer, 1, C), jnp.float32)),
        grid_spec=pltpu.PrefetchScalarGridSpec(
            num_scalar_prefetch=0,
            grid=(N, n_outer, n_inner),
            in_specs=[
                # NOTE: pipeline_mode=pl.Buffered(3) on the pred spec is an
                # option if profiling still shows exposed DMA; left at the
                # default depth to keep VMEM headroom on v7x (64 MiB).
                pl.BlockSpec((1, C, tile), in_map),
                pl.BlockSpec((1, 1, tile), in_map),
            ],
            out_specs=[pl.BlockSpec((1, 1, C), out_map),
                       pl.BlockSpec((1, 1, C), out_map)],
        ),
        compiler_params=pltpu.CompilerParams(
            dimension_semantics=("parallel", "parallel", "arbitrary"),
            vmem_limit_bytes=48 * 1024 * 1024,
        ),
    )(pred_flat, target_flat)

    # tiny epilogue in plain JAX: combine partials, batch mean, class sum / C
    num = jnp.sum(num_part.reshape(N, n_outer, C), axis=1)            # [N, C]
    den = jnp.sum(den_part.reshape(N, n_outer, C), axis=1)            # [N, C]
    dice_nc = 1.0 - (2.0 * num + SMOOTH) / (den + SMOOTH)             # [N, C]

    include = jnp.array([0.0 if c == IGNORE_INDEX else 1.0 for c in range(C)],
                        dtype=jnp.float32)
    per_class = jnp.mean(dice_nc, axis=0)              # reduction='mean' over the batch
    if CLASS_WEIGHT is not None:
        per_class = per_class * jnp.asarray(CLASS_WEIGHT, jnp.float32)
    total = jnp.sum(per_class * include)
    return LOSS_WEIGHT * total / C


def dice_loss_ref(pred, target):
    """Pure-JAX reference mirroring the PyTorch code (for validation)."""
    N, C, H, W = pred.shape
    sm = jax.nn.softmax(pred.astype(jnp.float32), axis=1)            # [N,C,H,W]
    t_cl = jnp.clip(target, 0, C - 1)
    onehot = jax.nn.one_hot(t_cl, C, dtype=jnp.float32)              # [N,H,W,C]
    valid = (target != IGNORE_INDEX).astype(jnp.float32).reshape(N, -1)
    total = 0.0
    for i in range(C):
        if i == IGNORE_INDEX:
            continue
        p_i = sm[:, i].reshape(N, -1)
        o_i = onehot[..., i].reshape(N, -1)
        num = jnp.sum(p_i * o_i * valid, axis=1) * 2.0 + SMOOTH
        den = jnp.sum(p_i ** EXPONENT + o_i ** EXPONENT, axis=1) + SMOOTH
        d = jnp.mean(1.0 - num / den)
        if CLASS_WEIGHT is not None:
            d = d * CLASS_WEIGHT[i]
        total = total + d
    return LOSS_WEIGHT * total / C


if __name__ == "__main__":
    key = jax.random.PRNGKey(0)
    k1, k2, k3, k4 = jax.random.split(key, 4)

    # primary check: small shapes consistent with the module's forward
    N, C, H, W = 2, 4, 16, 16
    pred = jax.random.normal(k1, (N, C, H, W), dtype=jnp.float32)
    target = jax.random.randint(k2, (N, H, W), 0, C).astype(jnp.int32)
    # include some ignored pixels to exercise the valid_mask / clamp path
    target = target.at[0, 0, :4].set(IGNORE_INDEX)

    loss = dice_loss(pred, target)
    jax.block_until_ready(loss)
    ref = dice_loss_ref(pred, target)
    # approx reciprocal in the in-kernel softmax normalization -> small tolerance
    assert abs(float(loss) - float(ref)) < 5e-3, (float(loss), float(ref))

    # second check: multi-tile spatial reduction with a ragged tail tile, a
    # megacore outer split and a skipped phantom trailing step.
    N2, C2, H2, W2 = 3, 5, 24, 24
    pred2 = jax.random.normal(k3, (N2, C2, H2, W2), dtype=jnp.float32)
    target2 = jax.random.randint(k4, (N2, H2, W2), 0, C2).astype(jnp.int32)
    target2 = target2.at[1, :3, :].set(IGNORE_INDEX)

    loss2 = dice_loss(pred2, target2, tile=128)
    jax.block_until_ready(loss2)
    ref2 = dice_loss_ref(pred2, target2)
    assert abs(float(loss2) - float(ref2)) < 5e-3, (float(loss2), float(ref2))

    print("KERNEL_OK")
</pallas_src>

<mosaic_0001>
module attributes {stable_mosaic.version = 11 : i64} {
  func.func @_dice_partial_kernel(%arg0: i32, %arg1: i32, %arg2: i32, %arg3: memref<1x4x256xf32, #tpu.memory_space<vmem>>, %arg4: memref<1x1x256xi32, #tpu.memory_space<vmem>>, %arg5: memref<1x1x4xf32, #tpu.memory_space<vmem>>, %arg6: memref<1x1x4xf32, #tpu.memory_space<vmem>>) attributes {dimension_semantics = [#tpu.dimension_semantics<parallel>, #tpu.dimension_semantics<parallel>, #tpu.dimension_semantics<arbitrary>], iteration_bounds = array<i64: 2, 1, 1>, scalar_prefetch = 0 : i64, scratch_operands = 0 : i64, tpu.core_type = #tpu.core_type<tc>, window_params = [{transform_indices = @transform_0, window_bounds = array<i64: 1, 4, 256>}, {transform_indices = @transform_1, window_bounds = array<i64: 1, 1, 256>}, {transform_indices = @transform_2, window_bounds = array<i64: 1, 1, 4>}, {transform_indices = @transform_3, window_bounds = array<i64: 1, 1, 4>}]} {
    %c0_i32 = arith.constant 0 : i32
    %0 = arith.cmpi eq, %arg2, %c0_i32 : i32
    %1 = arith.extui %0 : i1 to i32
    %c0_i32_0 = arith.constant 0 : i32
    %2 = arith.cmpi ne, %1, %c0_i32_0 : i32
    scf.if %2 {
      %cst_26 = arith.constant 0.000000e+00 : f32
      %44 = vector.broadcast %cst_26 : f32 to vector<1x1x4xf32>
      %c0_27 = arith.constant 0 : index
      %c0_28 = arith.constant 0 : index
      %c0_29 = arith.constant 0 : index
      %45 = vector.load %arg5[%c0_27, %c0_28, %c0_29] : memref<1x1x4xf32, #tpu.memory_space<vmem>>, vector<1x1x4xf32>
      tpu.vector_store %arg5[%c0_27, %c0_28, %c0_29], %44 {strides = array<i32>} : memref<1x1x4xf32, #tpu.memory_space<vmem>>, vector<1x1x4xf32>,
      %cst_30 = arith.constant 0.000000e+00 : f32
      %46 = vector.broadcast %cst_30 : f32 to vector<1x1x4xf32>
      %c0_31 = arith.constant 0 : index
      %c0_32 = arith.constant 0 : index
      %c0_33 = arith.constant 0 : index
      %47 = vector.load %arg6[%c0_31, %c0_32, %c0_33] : memref<1x1x4xf32, #tpu.memory_space<vmem>>, vector<1x1x4xf32>
      tpu.vector_store %arg6[%c0_31, %c0_32, %c0_33], %46 {strides = array<i32>} : memref<1x1x4xf32, #tpu.memory_space<vmem>>, vector<1x1x4xf32>,
    } else {
    }
    %c0 = arith.constant 0 : index
    %c0_1 = arith.constant 0 : index
    %c0_2 = arith.constant 0 : index
    %3 = vector.load %arg3[%c0, %c0_1, %c0_2] : memref<1x4x256xf32, #tpu.memory_space<vmem>>, vector<1x4x256xf32>
    %c0_3 = arith.constant 0 : index
    %c0_4 = arith.constant 0 : index
    %c0_5 = arith.constant 0 : index
    %4 = vector.load %arg4[%c0_3, %c0_4, %c0_5] : memref<1x1x256xi32, #tpu.memory_space<vmem>>, vector<1x1x256xi32>
    %cst = arith.constant dense<0xFF800000> : vector<1x256xf32>
    %5 = vector.multi_reduction <maximumf>, %3, %cst [1] : vector<1x4x256xf32> to vector<1x256xf32>
    %6 = vector.shape_cast %5 : vector<1x256xf32> to vector<1x1x256xf32>
    %7 = vector.broadcast %6 : vector<1x1x256xf32> to vector<1x4x256xf32>
    %8 = arith.subf %3, %7 : vector<1x4x256xf32>
    %9 = math.exp %8 : vector<1x4x256xf32>
    %cst_6 = arith.constant dense<0.000000e+00> : vector<1x256xf32>
    %10 = vector.multi_reduction <add>, %9, %cst_6 [1] : vector<1x4x256xf32> to vector<1x256xf32>
    %11 = vector.shape_cast %10 : vector<1x256xf32> to vector<1x1x256xf32>
    %12 = tpu.reciprocal %11 {approx = true} : vector<1x1x256xf32> -> vector<1x1x256xf32>
    %13 = vector.broadcast %12 : vector<1x1x256xf32> to vector<1x4x256xf32>
    %14 = arith.mulf %9, %13 : vector<1x4x256xf32>
    %c0_i32_7 = arith.constant 0 : i32
    %c3_i32 = arith.constant 3 : i32
    %15 = vector.broadcast %c0_i32_7 : i32 to vector<1x1x256xi32>
    %16 = arith.maxsi %15, %4 : vector<1x1x256xi32>
    %17 = vector.broadcast %c3_i32 : i32 to vector<1x1x256xi32>
    %18 = arith.minsi %17, %16 : vector<1x1x256xi32>
    %19 = tpu.iota {dimensions = array<i32: 1>} : vector<1x4x256xi32>
    %20 = vector.broadcast %18 : vector<1x1x256xi32> to vector<1x4x256xi32>
    %21 = arith.cmpi eq, %19, %20 : vector<1x4x256xi32>
    %c255_i32 = arith.constant 255 : i32
    %22 = vector.broadcast %c255_i32 : i32 to vector<1x1x256xi32>
    %23 = arith.cmpi ne, %4, %22 : vector<1x1x256xi32>
    %24 = arith.mulf %14, %14 : vector<1x4x256xf32>
    %cst_8 = arith.constant 1.000000e+00 : f32
    %cst_9 = arith.constant 0.000000e+00 : f32
    %25 = vector.broadcast %cst_8 : f32 to vector<1x4x256xf32>
    %26 = vector.broadcast %cst_9 : f32 to vector<1x4x256xf32>
    %27 = arith.select %21, %25, %26 : vector<1x4x256xi1>, vector<1x4x256xf32>
    %28 = vector.broadcast %23 : vector<1x1x256xi1> to vector<1x4x256xi1>
    %29 = arith.andi %21, %28 : vector<1x4x256xi1>
    %cst_10 = arith.constant 0.000000e+00 : f32
    %30 = vector.broadcast %cst_10 : f32 to vector<1x4x256xf32>
    %31 = arith.select %29, %14, %30 : vector<1x4x256xi1>, vector<1x4x256xf32>
    %cst_11 = arith.constant dense<0.000000e+00> : vector<1x4xf32>
    %32 = vector.multi_reduction <add>, %31, %cst_11 [2] : vector<1x4x256xf32> to vector<1x4xf32>
    %cst_12 = arith.constant dense<0.000000e+00> : vector<1x4xf32>
    %33 = vector.multi_reduction <add>, %24, %cst_12 [2] : vector<1x4x256xf32> to vector<1x4xf32>
    %cst_13 = arith.constant dense<0.000000e+00> : vector<1x4xf32>
    %34 = vector.multi_reduction <add>, %27, %cst_13 [2] : vector<1x4x256xf32> to vector<1x4xf32>
    %35 = arith.addf %33, %34 : vector<1x4xf32>
    %c0_14 = arith.constant 0 : index
    %c0_15 = arith.constant 0 : index
    %c0_16 = arith.constant 0 : index
    %36 = vector.load %arg5[%c0_14, %c0_15, %c0_16] : memref<1x1x4xf32, #tpu.memory_space<vmem>>, vector<1x1x4xf32>
    %37 = vector.shape_cast %32 : vector<1x4xf32> to vector<1x1x4xf32>
    %38 = arith.addf %36, %37 : vector<1x1x4xf32>
    %c0_17 = arith.constant 0 : index
    %c0_18 = arith.constant 0 : index
    %c0_19 = arith.constant 0 : index
    %39 = vector.load %arg5[%c0_17, %c0_18, %c0_19] : memref<1x1x4xf32, #tpu.memory_space<vmem>>, vector<1x1x4xf32>
    tpu.vector_store %arg5[%c0_17, %c0_18, %c0_19], %38 {strides = array<i32>} : memref<1x1x4xf32, #tpu.memory_space<vmem>>, vector<1x1x4xf32>,
    %c0_20 = arith.constant 0 : index
    %c0_21 = arith.constant 0 : index
    %c0_22 = arith.constant 0 : index
    %40 = vector.load %arg6[%c0_20, %c0_21, %c0_22] : memref<1x1x4xf32, #tpu.memory_space<vmem>>, vector<1x1x4xf32>
    %41 = vector.shape_cast %35 : vector<1x4xf32> to vector<1x1x4xf32>
    %42 = arith.addf %40, %41 : vector<1x1x4xf32>
    %c0_23 = arith.constant 0 : index
    %c0_24 = arith.constant 0 : index
    %c0_25 = arith.constant 0 : index
    %43 = vector.load %arg6[%c0_23, %c0_24, %c0_25] : memref<1x1x4xf32, #tpu.memory_space<vmem>>, vector<1x1x4xf32>
    tpu.vector_store %arg6[%c0_23, %c0_24, %c0_25], %42 {strides = array<i32>} : memref<1x1x4xf32, #tpu.memory_space<vmem>>, vector<1x1x4xf32>,
    return
  }
  func.func @transform_0(%arg0: i32, %arg1: i32, %arg2: i32) -> (i32, i32, i32) {
    %c1_i32 = arith.constant 1 : i32
    %0 = arith.muli %arg1, %c1_i32 : i32
    %1 = arith.addi %0, %arg2 : i32
    %c0_i32 = arith.constant 0 : i32
    %c0_i32_0 = arith.constant 0 : i32
    return %arg0, %c0_i32, %1 : i32, i32, i32
  }
  func.func @transform_1(%arg0: i32, %arg1: i32, %arg2: i32) -> (i32, i32, i32) {
    %c1_i32 = arith.constant 1 : i32
    %0 = arith.muli %arg1, %c1_i32 : i32
    %1 = arith.addi %0, %arg2 : i32
    %c0_i32 = arith.constant 0 : i32
    %c0_i32_0 = arith.constant 0 : i32
    return %arg0, %c0_i32, %1 : i32, i32, i32
  }
  func.func @transform_2(%arg0: i32, %arg1: i32, %arg2: i32) -> (i32, i32, i32) {
    %c1_i32 = arith.constant 1 : i32
    %0 = arith.muli %arg0, %c1_i32 : i32
    %1 = arith.addi %0, %arg1 : i32
    %c0_i32 = arith.constant 0 : i32
    %c0_i32_0 = arith.constant 0 : i32
    %c0_i32_1 = arith.constant 0 : i32
    return %1, %c0_i32, %c0_i32_0 : i32, i32, i32
  }
  func.func @transform_3(%arg0: i32, %arg1: i32, %arg2: i32) -> (i32, i32, i32) {
    %c1_i32 = arith.constant 1 : i32
    %0 = arith.muli %arg0, %c1_i32 : i32
    %1 = arith.addi %0, %arg1 : i32
    %c0_i32 = arith.constant 0 : i32
    %c0_i32_0 = arith.constant 0 : i32
    %c0_i32_1 = arith.constant 0 : i32
    return %1, %c0_i32, %c0_i32_0 : i32, i32, i32
  }
}

</mosaic_0001>

<llo_original>
// kernel: tpu_custom_call.1
$region0: #{tpu_custom_call.1}
  #allocation0 [shape = 'u32[]', space=smem, size = 0x4, offset = 0x4, fixed_abs, tag = 'smem constant byte address 0x4 - core index']
  #allocation1 [shape = 'u32[144,128]{1,0:T(1,128)}', space=vmem, size = 0x12000, scoped, tag = 'internal scratch']
  %s0 = inlined_call_operand.hbm [shape: f32[2,4,256], index: 0, kind: input, shape index: {}]
  %s1 = inlined_call_operand.hbm [shape: s32[2,1,256], index: 1, kind: input, shape index: {}]
  %s2 = inlined_call_operand.hbm [shape: f32[2,1,4], index: 2, kind: output, shape index: {0}]
  %s3 = inlined_call_operand.hbm [shape: f32[2,1,4], index: 3, kind: output, shape index: {1}]
  %4 = xla_tuple %s2, %s3
  %s5 = sld [smem:[#allocation0]]
  $region61: #{tpu_custom_call.1} parent=0
    _
  %s7 = ssub.s32 1, %s5
  %s8 = scalar_select 0, %s7, %s5
  $region1: #{tpu_custom_call.1} parent=0
    #allocation2 [shape = 'u8[8192]{0}', space=vmem, size = 0x2000, scoped, tag = 'input window, operand 0']
    #allocation3 [shape = 's32[2]{0}', space=sflag, size = 0x8, scoped, tag = 'scoped memory for tpu_custom_call.1']
    #allocation4 [shape = 's32[2]{0}', space=sflag, size = 0x8, scoped, tag = 'scoped memory for tpu_custom_call.1']
    #allocation5 [shape = 'u8[2048]{0}', space=vmem, size = 0x800, scoped, tag = 'input window, operand 1']
    #allocation6 [shape = 's32[2]{0}', space=sflag, size = 0x8, scoped, tag = 'scoped memory for tpu_custom_call.1']
    #allocation7 [shape = 'u8[1024]{0}', space=vmem, size = 0x400, scoped, tag = 'output window, operand 0']
    #allocation8 [shape = 'u8[1024]{0}', space=vmem, size = 0x400, scoped, tag = 'output window, operand 1']
    #allocation9 [shape = 's32[2]{0}', space=sflag, size = 0x8, scoped, tag = 'scoped memory for tpu_custom_call.1']
    %9 = vsyncpa [#allocation3], 0
    %s10 = scalar_lea.sflag [#allocation3], 1
    %11 = vsyncpa %s10, 0
    %12 = vsyncpa [#allocation6], 0
    %s13 = scalar_lea.sflag [#allocation6], 1
    %14 = vsyncpa %s13, 0
    %15 = vsyncpa [#allocation4], 0
    %s16 = scalar_lea.sflag [#allocation4], 1
    %17 = vsyncpa %s16, 0
    %18 = vsyncpa [#allocation9], 0
    %s19 = scalar_lea.sflag [#allocation9], 1
    %20 = vsyncpa %s19, 0
    loop: start=0, step=1, limit=4
    $region2: #{tpu_custom_call.1} parent=1 // loop_pre_header
      _
    $region3: #{tpu_custom_call.1} parent=1 // loop_header
      %s22 = sphi 0, %s26
      %p23 = scmp.ge.s32.totalorder %s22, 4
      %s29 = sphi 0, %s48
      %s30 = sphi 0, %s44
      %s31 = sphi 0, %s40
      %s32 = sphi 0, %s29
      %s33 = sphi 0, %s30
      %s34 = sphi 0, %s31
      %s35 = sphi 0, %s32
      %s36 = sphi 0, %s33
      %s37 = sphi 0, %s34
      %s55 = sphi 0, %s57
      %s58 = sphi 0, %s55
      %s59 = sphi 0, %s58
      %s75 = sphi 0, %s59
      %s85 = sphi 0, %s87
      %s88 = sphi 0, %s85
      %s89 = sphi 0, %s88
      %s105 = sphi 0, %s89
      %s113 = sphi 0, %s115
      %s116 = sphi 0, %s113
      %s117 = sphi 0, %s116
      %s133 = sphi 0, %s117
      %s141 = sphi 0, %s143
      %s144 = sphi 0, %s141
      %s145 = sphi 0, %s144
      %s161 = sphi 0, %s145
    $region4: #{tpu_custom_call.1} parent=1 // loop_header_branch
      %25 = sbr.rel (%p23) target = $region8
    $region5: #{tpu_custom_call.1} parent=1 // loop_body
      %s27 = ssub.s32 %s22, 1
      %s28 = ssub.s32 %s22, 2
      %s38 = sadd.s32 1, %s31
      %p39 = scmp.ge.s32.totalorder %s38, 1
      %s40 = scalar_select %p39, 0, %s38
      %s41 = sadd.s32 1, %s30
      %s42 = scalar_select %p39, %s41, %s30
      %p43 = scmp.ge.s32.totalorder %s42, 1
      %s44 = scalar_select %p43, 0, %s42
      %s45 = sadd.s32 1, %s29
      %s46 = scalar_select %p43, %s45, %s29
      %p47 = scmp.ge.s32.totalorder %s46, 2
      %s48 = scalar_select %p47, 0, %s46
      %s49 = sadd.s32 %s30, %s31
      %s50 = sadd.s32 %s44, %s40
      %s51 = ssub.s32 %s29, %s48
      %s52 = ssub.s32 %s49, %s50
      %s53 = sor.u32 %s51, %s52
      %p54 = scmp.eq.s32.totalorder %s53, 0
      %s56 = sadd.s32 %s55, 1
      %s57 = scalar_select %p54, %s55, %s56
      %p60 = pneg %p54
      %p61 = scmp.eq.s32.totalorder %s22, 1
      %p62 = por %p60, %p61
      %p63 = scmp.ne.s32.totalorder %s55, %s58
      %p64 = scmp.eq.s32.totalorder %s22, 0
      %p65 = por %p63, %p64
      %p66 = scmp.ne.s32.totalorder %s55, %s58
      %p67 = scmp.eq.s32.totalorder %s27, 1
      %p68 = por %p66, %p67
      %p69 = scmp.ne.s32.totalorder %s58, %s59
      %p70 = scmp.eq.s32.totalorder %s27, 0
      %p71 = por %p69, %p70
      %p72 = scmp.ne.s32.totalorder %s58, %s59
      %p73 = scmp.eq.s32.totalorder %s28, 1
      %p74 = por %p72, %p73
      %p76 = scmp.ne.s32.totalorder %s59, %s75
      %p77 = scmp.eq.s32.totalorder %s28, 0
      %p78 = por %p76, %p77
      %s79 = sadd.s32 %s30, %s31
      %s80 = sadd.s32 %s44, %s40
      %s81 = ssub.s32 %s29, %s48
      %s82 = ssub.s32 %s79, %s80
      %s83 = sor.u32 %s81, %s82
      %p84 = scmp.eq.s32.totalorder %s83, 0
      %s86 = sadd.s32 %s85, 1
      %s87 = scalar_select %p84, %s85, %s86
      %p90 = pneg %p84
      %p91 = scmp.eq.s32.totalorder %s22, 1
      %p92 = por %p90, %p91
      %p93 = scmp.ne.s32.totalorder %s85, %s88
      %p94 = scmp.eq.s32.totalorder %s22, 0
      %p95 = por %p93, %p94
      %p96 = scmp.ne.s32.totalorder %s85, %s88
      %p97 = scmp.eq.s32.totalorder %s27, 1
      %p98 = por %p96, %p97
      %p99 = scmp.ne.s32.totalorder %s88, %s89
      %p100 = scmp.eq.s32.totalorder %s27, 0
      %p101 = por %p99, %p100
      %p102 = scmp.ne.s32.totalorder %s88, %s89
      %p103 = scmp.eq.s32.totalorder %s28, 1
      %p104 = por %p102, %p103
      %p106 = scmp.ne.s32.totalorder %s89, %s105
      %p107 = scmp.eq.s32.totalorder %s28, 0
      %p108 = por %p106, %p107
      %s109 = sadd.s32 %s29, %s30
      %s110 = sadd.s32 %s48, %s44
      %s111 = ssub.s32 %s109, %s110
      %p112 = scmp.eq.s32.totalorder %s111, 0
      %s114 = sadd.s32 %s113, 1
      %s115 = scalar_select %p112, %s113, %s114
      %p118 = pneg %p112
      %p119 = scmp.eq.s32.totalorder %s22, 1
      %p120 = por %p118, %p119
      %p121 = scmp.ne.s32.totalorder %s113, %s116
      %p122 = scmp.eq.s32.totalorder %s22, 0
      %p123 = por %p121, %p122
      %p124 = scmp.ne.s32.totalorder %s113, %s116
      %p125 = scmp.eq.s32.totalorder %s27, 1
      %p126 = por %p124, %p125
      %p127 = scmp.ne.s32.totalorder %s116, %s117
      %p128 = scmp.eq.s32.totalorder %s27, 0
      %p129 = por %p127, %p128
      %p130 = scmp.ne.s32.totalorder %s116, %s117
      %p131 = scmp.eq.s32.totalorder %s28, 1
      %p132 = por %p130, %p131
      %p134 = scmp.ne.s32.totalorder %s117, %s133
      %p135 = scmp.eq.s32.totalorder %s28, 0
      %p136 = por %p134, %p135
      %s137 = sadd.s32 %s29, %s30
      %s138 = sadd.s32 %s48, %s44
      %s139 = ssub.s32 %s137, %s138
      %p140 = scmp.eq.s32.totalorder %s139, 0
      %s142 = sadd.s32 %s141, 1
      %s143 = scalar_select %p140, %s141, %s142
      %p146 = pneg %p140
      %p147 = scmp.eq.s32.totalorder %s22, 1
      %p148 = por %p146, %p147
      %p149 = scmp.ne.s32.totalorder %s141, %s144
      %p150 = scmp.eq.s32.totalorder %s22, 0
      %p151 = por %p149, %p150
      %p152 = scmp.ne.s32.totalorder %s141, %s144
      %p153 = scmp.eq.s32.totalorder %s27, 1
      %p154 = por %p152, %p153
      %p155 = scmp.ne.s32.totalorder %s144, %s145
      %p156 = scmp.eq.s32.totalorder %s27, 0
      %p157 = por %p155, %p156
      %p158 = scmp.ne.s32.totalorder %s144, %s145
      %p159 = scmp.eq.s32.totalorder %s28, 1
      %p160 = por %p158, %p159
      %p162 = scmp.ne.s32.totalorder %s145, %s161
      %p163 = scmp.eq.s32.totalorder %s28, 0
      %p164 = por %p162, %p163
      %p165 = scmp.le.s32.totalorder 1, %s22
      %p166 = scmp.lt.s32.totalorder %s22, 3
      %p167 = pnand %p165, %p166
      %p168 = pneg %p167
      // Predicated region
      $region9: #{tpu_custom_call.1} parent=5 // pred_check
        _
      $region10: #{tpu_custom_call.1} parent=5 // pred_check_branch
        %170 = sbr.rel (%p167) target = $region12
      $region11: #{tpu_custom_call.1} parent=5 // pred_region
        %s171 = ssub.s32 %s22, 1
      $region12: #{tpu_custom_call.1} parent=5 // pred_fallthru
        _
      %p172 = scmp.lt.s32.totalorder %s22, 2
      // Predicated region
      $region13: #{tpu_custom_call.1} parent=5 // pred_check
        %p173 = pneg %p172
      $region14: #{tpu_custom_call.1} parent=5 // pred_check_branch
        %175 = sbr.rel (%p173) target = $region16
      $region15: #{tpu_custom_call.1} parent=5 // pred_region
        // Predicated region
        $region17: #{tpu_custom_call.1} parent=15 // pred_check
          %p176 = pneg %p65
        $region18: #{tpu_custom_call.1} parent=15 // pred_check_branch
          %178 = sbr.rel (%p176) target = $region20
        $region19: #{tpu_custom_call.1} parent=15 // pred_region
          %s179 = sand.u32 %s55, 1
          %s180 = scalar_lea.sflag [#allocation3], %s179
          %s181 = sand.u32 %s55, 1
          %s182 = smul.addr %s181, 8
          %s183 = scalar_lea.vmem [#allocation2], %s182
          %s184 = sadd.s32 %s30, %s31
          %s185 = smul.u32 2, %s184
          %s187 = ssub.s32 128, 128
          %188 = vsyncadd %s180, %s187
          %s189 = smul.addr %s29, 2
          %s190 = sadd.s32 %s185, %s189
          %s191 = smul.addr %s190, 64
          %s192 = scalar_lea.hbm %s0, %s191
          %s194 = sshll.u32 %s183, 4
          %s195 = int_to_ptr.vmem [resolvable:$true] %s194
          %197 = dma.hbm_to_vmem [thread:$0]  %s192, 128, %s195, %s180
        $region20: #{tpu_custom_call.1} parent=15 // pred_fallthru
          _
        // Predicated region
        $region21: #{tpu_custom_call.1} parent=15 // pred_check
          %p198 = pneg %p95
        $region22: #{tpu_custom_call.1} parent=15 // pred_check_branch
          %200 = sbr.rel (%p198) target = $region24
        $region23: #{tpu_custom_call.1} parent=15 // pred_region
          %s201 = sand.u32 %s85, 1
          %s202 = scalar_lea.sflag [#allocation6], %s201
          %s203 = sand.u32 %s85, 1
          %s204 = smul.addr %s203, 2
          %s205 = scalar_lea.vmem [#allocation5], %s204
          %s206 = sadd.s32 %s30, %s31
          %s207 = smul.u32 2, %s206
          %s209 = ssub.s32 32, 32
          %210 = vsyncadd %s202, %s209
          %s211 = smul.addr %s29, 2
          %s212 = sadd.s32 %s207, %s211
          %s213 = smul.addr %s212, 16
          %s214 = scalar_lea.hbm %s1, %s213
          %s216 = sshll.u32 %s205, 4
          %s217 = int_to_ptr.vmem [resolvable:$true] %s216
          %219 = dma.hbm_to_vmem [thread:$0]  %s214, 32, %s217, %s202
        $region24: #{tpu_custom_call.1} parent=15 // pred_fallthru
          _
      $region16: #{tpu_custom_call.1} parent=5 // pred_fallthru
        _
      %p220 = scmp.le.s32.totalorder 1, %s22
      %p221 = scmp.lt.s32.totalorder %s22, 3
      %p222 = pnand %p220, %p221
      %p223 = pneg %p222
      // Predicated region
      $region25: #{tpu_custom_call.1} parent=5 // pred_check
        _
      $region26: #{tpu_custom_call.1} parent=5 // pred_check_branch
        %225 = sbr.rel (%p222) target = $region28
      $region27: #{tpu_custom_call.1} parent=5 // pred_region
        %s226 = ssub.s32 %s22, 1
        %s227 = sand.u32 %s58, 1
        %s228 = scalar_lea.sflag [#allocation3], %s227
        %s229 = sand.u32 %s58, 1
        %s230 = smul.addr %s229, 8
        %s231 = scalar_lea.vmem [#allocation2], %s230
        // Predicated region
        $region29: #{tpu_custom_call.1} parent=27 // pred_check
          %p232 = pneg %p71
        $region30: #{tpu_custom_call.1} parent=27 // pred_check_branch
          %234 = sbr.rel (%p232) target = $region32
        $region31: #{tpu_custom_call.1} parent=27 // pred_region
          %235 = dma.done %s228, 128
        $region32: #{tpu_custom_call.1} parent=27 // pred_fallthru
          _
        %s236 = sand.u32 %s88, 1
        %s237 = scalar_lea.sflag [#allocation6], %s236
        %s238 = sand.u32 %s88, 1
        %s239 = smul.addr %s238, 2
        %s240 = scalar_lea.vmem [#allocation5], %s239
        // Predicated region
        $region33: #{tpu_custom_call.1} parent=27 // pred_check
          %p241 = pneg %p101
        $region34: #{tpu_custom_call.1} parent=27 // pred_check_branch
          %243 = sbr.rel (%p241) target = $region36
        $region35: #{tpu_custom_call.1} parent=27 // pred_region
          %244 = dma.done %s237, 32
        $region36: #{tpu_custom_call.1} parent=27 // pred_fallthru
          _
        %s245 = sand.u32 %s58, 1
        %s246 = scalar_lea.sflag [#allocation3], %s245
        %s247 = sand.u32 %s58, 1
        %s248 = smul.addr %s247, 8
        %s249 = scalar_lea.vmem [#allocation2], %s248
        %p250 = pneg %p71
        %p251 = pneg %p68
        %s252 = sand.u32 %s88, 1
        %s253 = scalar_lea.sflag [#allocation6], %s252
        %s254 = sand.u32 %s88, 1
        %s255 = smul.addr %s254, 2
        %s256 = scalar_lea.vmem [#allocation5], %s255
        %p257 = pneg %p101
        %p258 = pneg %p98
        %p259 = pneg %p129
        %p260 = pneg %p126
        %s261 = sand.u32 %s116, 1
        %s262 = scalar_lea.sflag [#allocation4], %s261
        %s263 = sand.u32 %s116, 1
        %s264 = scalar_lea.vmem [#allocation7], %s263
        %p265 = pneg %p157
        %p266 = pneg %p154
        %s267 = sand.u32 %s144, 1
        %s268 = scalar_lea.sflag [#allocation9], %s267
        %s269 = sand.u32 %s144, 1
        %s270 = scalar_lea.vmem [#allocation8], %s269
        %s271 = sadd.s32 %s33, %s34
        %s272 = smul.u32 2, %s271
        %s273 = sadd.s32 %s33, %s34
        %s274 = smul.u32 2, %s273
        %s275 = sadd.s32 %s32, %s33
        %s276 = sadd.s32 %s32, %s33
        %p277 = scmp.eq.s32.totalorder %s34, 0
        // Predicated region
        $region37: #{tpu_custom_call.1} parent=27 // pred_check
          %p278 = pneg %p277
        $region38: #{tpu_custom_call.1} parent=27 // pred_check_branch
          %280 = sbr.rel (%p278) target = $region40
        $region39: #{tpu_custom_call.1} parent=27 // pred_region
          %vm281 = vcmask 24576
          %282 = vst.msk [vmem:[%s264] sm:$0x1] %vm281, 0.0
          %283 = vst.msk [vmem:[%s270] sm:$0x1] %vm281, 0.0
        $region40: #{tpu_custom_call.1} parent=27 // pred_fallthru
          _
        %v284 = vld [vmem:[%s231] sm:$0xff]
        %v285 = vld [vmem:[%s240] sm:$0x3]
        %v287 = vcombine.high %v284, %v284
        %vm289 = vcmask 1043456
        %v290 = vsel %vm289, %v284, -inf
        %v291 = vrot.slane %v290, 4
        %v292 = vmax.f32 %v290, %v291
        %v293 = vrot.slane %v292, 2
        %v294 = vmax.f32 %v292, %v293
        %v295 = vrot.slane %v294, 1
        %v296 = vmax.f32 %v294, %v295
        %v297 = vsel %vm289, %v287, -inf
        %v298 = vrot.slane %v297, 4
        %v299 = vmax.f32 %v297, %v298
        %v300 = vrot.slane %v299, 2
        %v301 = vmax.f32 %v299, %v300
        %v302 = vrot.slane %v301, 1
        %v303 = vmax.f32 %v301, %v302
        %v306 = vcombine.low %v296, %v303
        %v308 = vsub.f32 %v284, %v306
        %v309 = vmul.f32 %v308, 1.442695
        %v310 = vpow.pop %v309
        %v312 = vcombine.high %v310, %v310
        %v314 = vsel %vm289, %v310, 0.0
        %v315 = vrot.slane %v314, 4
        %v316 = vadd.f32 %v314, %v315
        %v317 = vrot.slane %v316, 2
        %v318 = vadd.f32 %v316, %v317
        %v319 = vrot.slane %v318, 1
        %v320 = vadd.f32 %v318, %v319
        %v321 = vsel %vm289, %v312, 0.0
        %v322 = vrot.slane %v321, 4
        %v323 = vadd.f32 %v321, %v322
        %v324 = vrot.slane %v323, 2
        %v325 = vadd.f32 %v323, %v324
        %v326 = vrot.slane %v325, 1
        %v327 = vadd.f32 %v325, %v326
        %v328 = vrcp.pop %v320
        %v329 = vrcp.pop %v327
        %v332 = vcombine.low %v328, %v329
        %v334 = vmul.f32 %v310, %v332
        %vm335 = vcmp.gt.s32.totalorder %v285, 0
        %v336 = vsel %vm335, %v285, 0
        %vm337 = vcmp.lt.s32.totalorder %v336, 3
        %v338 = vsel %vm337, %v336, 3
        %v339 = vlaneseq
        %v340 = vshrl.u32 %v339, 7
        %v341 = vlaneseq
        %v342 = vshrl.u32 %v341, 7
        %v343 = vsub.s32 0, %v342
        %v344 = vrot.slane %v338, %v343
        %v345 = vlaneseq
        %v346 = vshrl.u32 %v345, 7
        %v347 = vsub.s32 1, %v346
        %v348 = vrot.slane %v338, %v347
        %vm349 = vcmp.eq.s32.totalorder %v340, %v344
        %vm350 = vcmp.eq.s32.totalorder %v340, %v348
        %vm351 = vcmp.ne.s32.totalorder %v285, 255
        %v352 = vmul.f32 %v334, %v334
        %v353 = vsel %vm349, 1.0, 0.0
        %v354 = vsel %vm350, 1.0, 0.0
        %v355 = vsel %vm351, 1, 0
        %v356 = vlaneseq
        %v357 = vshrl.u32 %v356, 7
        %v358 = vsub.s32 0, %v357
        %v359 = vrot.slane %v355, %v358
        %v360 = vlaneseq
        %v361 = vshrl.u32 %v360, 7
        %v362 = vsub.s32 1, %v361
        %v363 = vrot.slane %v355, %v362
        %vm364 = vcmp.eq.s32.totalorder %v359, 1
        %vm365 = vcmp.eq.s32.totalorder %v363, 1
        %vm366 = vmand %vm349, %vm364
        %vm367 = vmand %vm350, %vm365
        %v369 = vcombine.high %v334, %v334
        %v371 = vsel %vm366, %v334, 0.0
        %v372 = vsel %vm367, %v369, 0.0
        %v373 = vsel %vm289, %v371, 0.0
        %v374 = vsel %vm289, %v372, 0.0
        %v375 = vadd.f32 %v373, %v374
        %376 = vadd.xlane.f32.xlu0 %v375
        %v377 = vpop.xlane.xlu0 %376
        %v379 = vcombine.high %v352, %v352
        %v381 = vsel %vm289, %v352, 0.0
        %v382 = vsel %vm289, %v379, 0.0
        %v383 = vadd.f32 %v381, %v382
        %384 = vadd.xlane.f32.xlu0 %v383
        %v385 = vpop.xlane.xlu0 %384
        %v386 = vsel %vm289, %v353, 0.0
        %v387 = vsel %vm289, %v354, 0.0
        %v388 = vadd.f32 %v386, %v387
        %389 = vadd.xlane.f32.xlu0 %v388
        %v390 = vpop.xlane.xlu0 %389
        %v391 = vadd.f32 %v385, %v390
        %v392 = vld [vmem:[%s264] sm:$0x1]
        %v394 = vlaneseq
        %v395 = vshrl.u32 %v394, 7
        %v396 = vsub.s32 0, %v395
        %v397 = vrot.slane %v377, %v396
        %v398 = vlaneseq
        %v399 = vshrl.u32 %v398, 7
        %v400 = vsub.s32 1, %v399
        %v401 = vrot.slane %v377, %v400
        %v402 = vlaneseq
        %v403 = vshrl.u32 %v402, 7
        %v404 = vsub.s32 2, %v403
        %v405 = vrot.slane %v377, %v404
        %v406 = vlaneseq
        %v407 = vshrl.u32 %v406, 7
        %v408 = vsub.s32 3, %v407
        %v409 = vrot.slane %v377, %v408
        %v410 = vcombine.low %v397, %v401
        %v411 = vcombine.low %v405, %v409
        %v413 = vunpack.c.l.s4 1966171168
        %v414 = vunpack.c.0.s8 %v413
        %v415 = vlaneseq
        %v416 = vshrl.u32 %v415, 7
        %v417 = vsub.s32 %v414, %v416
        %v418 = vrot.slane %v410, %v417
        %v420 = vunpack.c.l.s4 1966171168
        %v421 = vunpack.c.0.s8 %v420
        %v422 = vlaneseq
        %v423 = vshrl.u32 %v422, 7
        %v424 = vsub.s32 %v421, %v423
        %v425 = vrot.slane %v411, %v424
        %v426 = vcombine.low %v418, %v425
        %v428 = vunpack.c.l.s4 1966171168
        %v429 = vunpack.c.0.s8 %v428
        %v430 = vlaneseq
        %v431 = vshrl.u32 %v430, 7
        %v432 = vsub.s32 %v429, %v431
        %v433 = vrot.slane %v426, %v432
        %434 = vset.pattern.permute.xlu0 0
        %435 = vperm.xlu0 %434, %v433
        %v436 = vpop.permute.xlu0 %435
        %v437 = vlaneseq
        %v438 = vand.u32 %v437, 127
        %v439 = vlaneseq
        %v440 = vshrl.u32 %v439, 7
        %v441 = vsub.s32 %v438, %v440
        %v442 = vrot.slane %v436, %v441
        %v444 = vunpack.c.l.s4 1966171168
        %v445 = vunpack.c.0.s8 %v444
        %v446 = vlaneseq
        %v447 = vshrl.u32 %v446, 7
        %v448 = vsub.s32 %v445, %v447
        %v449 = vrot.slane %v442, %v448
        %v451 = vunpack.c.l.s4 1966171168
        %v452 = vunpack.c.0.s8 %v451
        %v453 = vlaneseq
        %v454 = vshrl.u32 %v453, 7
        %v455 = vsub.s32 %v452, %v454
        %v456 = vrot.slane %v449, %v455
        %v458 = vadd.f32 %v392, %v456
        %vm459 = vcmask 24576
        %460 = vst.msk [vmem:[%s264] sm:$0x1] %vm459, %v458
        %v461 = vld [vmem:[%s270] sm:$0x1]
        %v463 = vlaneseq
        %v464 = vshrl.u32 %v463, 7
        %v465 = vsub.s32 0, %v464
        %v466 = vrot.slane %v391, %v465
        %v467 = vlaneseq
        %v468 = vshrl.u32 %v467, 7
        %v469 = vsub.s32 1, %v468
        %v470 = vrot.slane %v391, %v469
        %v471 = vlaneseq
        %v472 = vshrl.u32 %v471, 7
        %v473 = vsub.s32 2, %v472
        %v474 = vrot.slane %v391, %v473
        %v475 = vlaneseq
        %v476 = vshrl.u32 %v475, 7
        %v477 = vsub.s32 3, %v476
        %v478 = vrot.slane %v391, %v477
        %v479 = vcombine.low %v466, %v470
        %v480 = vcombine.low %v474, %v478
        %v482 = vunpack.c.l.s4 1966171168
        %v483 = vunpack.c.0.s8 %v482
        %v484 = vlaneseq
        %v485 = vshrl.u32 %v484, 7
        %v486 = vsub.s32 %v483, %v485
        %v487 = vrot.slane %v479, %v486
        %v489 = vunpack.c.l.s4 1966171168
        %v490 = vunpack.c.0.s8 %v489
        %v491 = vlaneseq
        %v492 = vshrl.u32 %v491, 7
        %v493 = vsub.s32 %v490, %v492
        %v494 = vrot.slane %v480, %v493
        %v495 = vcombine.low %v487, %v494
        %v497 = vunpack.c.l.s4 1966171168
        %v498 = vunpack.c.0.s8 %v497
        %v499 = vlaneseq
        %v500 = vshrl.u32 %v499, 7
        %v501 = vsub.s32 %v498, %v500
        %v502 = vrot.slane %v495, %v501
        %503 = vset.pattern.permute.xlu0 0
        %504 = vperm.xlu0 %503, %v502
        %v505 = vpop.permute.xlu0 %504
        %v506 = vlaneseq
        %v507 = vshrl.u32 %v506, 7
        %v508 = vsub.s32 %v438, %v507
        %v509 = vrot.slane %v505, %v508
        %v511 = vunpack.c.l.s4 1966171168
        %v512 = vunpack.c.0.s8 %v511
        %v513 = vlaneseq
        %v514 = vshrl.u32 %v513, 7
        %v515 = vsub.s32 %v512, %v514
        %v516 = vrot.slane %v509, %v515
        %v518 = vunpack.c.l.s4 1966171168
        %v519 = vunpack.c.0.s8 %v518
        %v520 = vlaneseq
        %v521 = vshrl.u32 %v520, 7
        %v522 = vsub.s32 %v519, %v521
        %v523 = vrot.slane %v516, %v522
        %v525 = vadd.f32 %v461, %v523
        %526 = vst.msk [vmem:[%s270] sm:$0x1] %vm459, %v525
        %s527 = sand.u32 %s116, 1
        %s528 = scalar_lea.sflag [#allocation4], %s527
        %s529 = sand.u32 %s116, 1
        %s530 = scalar_lea.vmem [#allocation7], %s529
        %s531 = sand.u32 %s144, 1
        %s532 = scalar_lea.sflag [#allocation9], %s531
        %s533 = sand.u32 %s144, 1
        %s534 = scalar_lea.vmem [#allocation8], %s533
        // Predicated region
        $region41: #{tpu_custom_call.1} parent=27 // pred_check
          %p535 = pneg %p126
        $region42: #{tpu_custom_call.1} parent=27 // pred_check_branch
          %537 = sbr.rel (%p535) target = $region44
        $region43: #{tpu_custom_call.1} parent=27 // pred_region
          %s538 = sadd.s32 %s32, %s33
          %s540 = ssub.s32 16, 16
          %541 = vsyncadd %s528, %s540
          %s542 = smul.addr %s538, 16
          %s543 = scalar_lea.hbm %s2, %s542
          %s545 = sshll.u32 %s530, 4
          %s546 = int_to_ptr.vmem [resolvable:$true] %s545
          %548 = dma.vmem_to_hbm [thread:$0]  %s546, 16, %s543, %s528
        $region44: #{tpu_custom_call.1} parent=27 // pred_fallthru
          _
        // Predicated region
        $region45: #{tpu_custom_call.1} parent=27 // pred_check
          %p549 = pneg %p154
        $region46: #{tpu_custom_call.1} parent=27 // pred_check_branch
          %551 = sbr.rel (%p549) target = $region48
        $region47: #{tpu_custom_call.1} parent=27 // pred_region
          %s552 = sadd.s32 %s32, %s33
          %s554 = ssub.s32 16, 16
          %555 = vsyncadd %s532, %s554
          %s556 = smul.addr %s552, 16
          %s557 = scalar_lea.hbm %s3, %s556
          %s559 = sshll.u32 %s534, 4
          %s560 = int_to_ptr.vmem [resolvable:$true] %s559
          %562 = dma.vmem_to_hbm [thread:$0]  %s560, 16, %s557, %s532
        $region48: #{tpu_custom_call.1} parent=27 // pred_fallthru
          _
      $region28: #{tpu_custom_call.1} parent=5 // pred_fallthru
        _
      %p563 = scmp.le.s32.totalorder 2, %s22
      // Predicated region
      $region49: #{tpu_custom_call.1} parent=5 // pred_check
        %p564 = pneg %p563
      $region50: #{tpu_custom_call.1} parent=5 // pred_check_branch
        %566 = sbr.rel (%p564) target = $region52
      $region51: #{tpu_custom_call.1} parent=5 // pred_region
        %s567 = ssub.s32 %s22, 2
        // Predicated region
        $region53: #{tpu_custom_call.1} parent=51 // pred_check
          %p568 = pneg %p132
        $region54: #{tpu_custom_call.1} parent=51 // pred_check_branch
          %570 = sbr.rel (%p568) target = $region56
        $region55: #{tpu_custom_call.1} parent=51 // pred_region
          %s571 = sand.u32 %s117, 1
          %s572 = scalar_lea.sflag [#allocation4], %s571
          %s573 = sand.u32 %s117, 1
          %s574 = scalar_lea.vmem [#allocation7], %s573
          %575 = dma.done %s572, 16
        $region56: #{tpu_custom_call.1} parent=51 // pred_fallthru
          _
        // Predicated region
        $region57: #{tpu_custom_call.1} parent=51 // pred_check
          %p576 = pneg %p160
        $region58: #{tpu_custom_call.1} parent=51 // pred_check_branch
          %578 = sbr.rel (%p576) target = $region60
        $region59: #{tpu_custom_call.1} parent=51 // pred_region
          %s579 = sand.u32 %s145, 1
          %s580 = scalar_lea.sflag [#allocation9], %s579
          %s581 = sand.u32 %s145, 1
          %s582 = scalar_lea.vmem [#allocation8], %s581
          %583 = dma.done %s580, 16
        $region60: #{tpu_custom_call.1} parent=51 // pred_fallthru
          _
      $region52: #{tpu_custom_call.1} parent=5 // pred_fallthru
        _
    $region6: #{tpu_custom_call.1} parent=1 // loop_footer
      %s26 = sadd.s32 1, %s22
    $region7: #{tpu_custom_call.1} parent=1 // loop_footer_branch
      %21 = sbr.rel target = $region3
    $region8: #{tpu_custom_call.1} parent=1 // loop_exit
      _
    %584 = vsyncpa [#allocation3], 1
    %s585 = scalar_lea.sflag [#allocation3], 1
    %586 = vsyncpa %s585, 1
    %587 = vsyncpa [#allocation6], 1
    %s588 = scalar_lea.sflag [#allocation6], 1
    %589 = vsyncpa %s588, 1
    %590 = vsyncpa [#allocation4], 1
    %s591 = scalar_lea.sflag [#allocation4], 1
    %592 = vsyncpa %s591, 1
    %593 = vsyncpa [#allocation9], 1
    %s594 = scalar_lea.sflag [#allocation9], 1
    %595 = vsyncpa %s594, 1

</llo_original>
